<compile_context>
chip_gen: v7x
topology: tpu7x:2x2x1
jax: 0.10.0
libtpu: 0.0.40
codegen_flags: <defaults>
</compile_context>

<pallas_src>
import functools

import jax
import jax.numpy as jnp
from jax.experimental import pallas as pl
from jax.experimental.pallas import tpu as pltpu

EPS = 1e-6  # epsilon stabilizer used by incr()


def _round_up(x, m):
    return ((x + m - 1) // m) * m


def _lrp_body(rj_ref, ai_ref, w_ref, b_ref, out_ref):
    ai = ai_ref[...]                                   # [TB, In]  (input dtype)
    w = w_ref[...]                                     # [Out, In] (input dtype)
    rj = rj_ref[...].astype(jnp.float32)               # [TB, Out]

    # Z = Ai @ W^T : contract the In axis of both operands directly on the MXU
    # (no transposed copy of W); accumulate in f32.
    z = jax.lax.dot_general(
        ai, w,
        dimension_numbers=(((1,), (1,)), ((), ())),
        preferred_element_type=jnp.float32,
    )
    if b_ref is not None:
        z = z + b_ref[...].astype(jnp.float32)         # [1, Out] broadcast
    z = z + EPS                                        # incr(): epsilon rule

    s = rj / z                                         # S = Rj / Z  (f32)

    # Ci = S @ W : contract the Out axis; reuses the same resident W tile.
    ci = jax.lax.dot_general(
        s.astype(w.dtype), w,
        dimension_numbers=(((1,), (0,)), ((), ())),
        preferred_element_type=jnp.float32,
    )

    out_ref[...] = (ai.astype(jnp.float32) * ci).astype(out_ref.dtype)


def _kernel_with_bias(rj_ref, ai_ref, w_ref, b_ref, out_ref):
    _lrp_body(rj_ref, ai_ref, w_ref, b_ref, out_ref)


def _kernel_no_bias(rj_ref, ai_ref, w_ref, out_ref):
    _lrp_body(rj_ref, ai_ref, w_ref, None, out_ref)


def linear_lrp(Rj, Ai, W, b=None, *, block_batch=256):
    """LRP-epsilon relevance propagation through a linear layer.

    Rj: [B, Out], Ai: [B, In], W: [Out, In], b: [1, Out] or None -> Ri: [B, In]
    """
    B, In = Ai.shape
    Out, In_w = W.shape
    assert In_w == In and Rj.shape == (B, Out)

    # Lane-dense feature dims (multiples of 128); sublane-aligned batch tiles.
    In_p = _round_up(In, 128)
    Out_p = _round_up(Out, 128)
    TB = min(_round_up(block_batch, 8), _round_up(B, 8))
    n_tiles = pl.cdiv(B, TB)
    B_p = n_tiles * TB

    Ai_p = jnp.pad(Ai, ((0, B_p - B), (0, In_p - In)))
    Rj_p = jnp.pad(Rj, ((0, B_p - B), (0, Out_p - Out)))
    W_p = jnp.pad(W, ((0, Out_p - Out), (0, In_p - In)))

    in_specs = [
        pl.BlockSpec((TB, Out_p), lambda i: (i, 0)),      # Rj: batch-tiled
        pl.BlockSpec((TB, In_p), lambda i: (i, 0)),       # Ai: batch-tiled
        pl.BlockSpec((Out_p, In_p), lambda i: (0, 0)),    # W : VMEM-resident
    ]
    args = [Rj_p, Ai_p, W_p]
    if b is not None:
        b_p = jnp.pad(b, ((0, 0), (0, Out_p - Out)))
        in_specs.append(pl.BlockSpec((1, Out_p), lambda i: (0, 0)))
        args.append(b_p)
        kernel = _kernel_with_bias
    else:
        kernel = _kernel_no_bias

    # TODO(synk): for W too large to stay VMEM-resident (e.g. >~32 MiB on v7x),
    # add an Out grid axis ("arbitrary") with a Ci accumulator scratch.
    itemsize = jnp.dtype(Ai.dtype).itemsize
    vmem_est = (
        W_p.size * jnp.dtype(W.dtype).itemsize            # resident W
        + 2 * TB * (2 * In_p + Out_p) * itemsize          # double-buffered tiles
        + (Out_p * itemsize if b is not None else 0)
        + (4 << 20)                                       # headroom
    )
    vmem_limit = max(16 << 20, min(int(vmem_est), 64 << 20))

    out = pl.pallas_call(
        kernel,
        out_shape=jax.ShapeDtypeStruct((B_p, In_p), Ai.dtype),
        grid=(n_tiles,),
        in_specs=in_specs,
        out_specs=pl.BlockSpec((TB, In_p), lambda i: (i, 0)),
        compiler_params=pltpu.CompilerParams(
            dimension_semantics=("parallel",),
            vmem_limit_bytes=vmem_limit,
        ),
    )(*args)
    return out[:B, :In]


if __name__ == "__main__":
    key = jax.random.PRNGKey(0)
    k1, k2, k3 = jax.random.split(key, 3)

    batch, in_features, out_features = 8, 64, 32

    # rho = identity (LRP-0 / basic rule). Positive weights / activations keep
    # Z well away from zero, so the epsilon-rule division is well conditioned
    # for the numeric check (the previous test divided by near-zero Z, which
    # amplified benign matmul rounding differences past the tolerance).
    W = jax.random.uniform(k1, (out_features, in_features), jnp.float32,
                           minval=0.01, maxval=0.11)
    Ai = jax.random.uniform(k2, (batch, in_features), jnp.float32,
                            minval=0.1, maxval=1.1)
    Rj = jax.random.uniform(k3, (batch, out_features), jnp.float32)

    # keep_conservative(bias): bias is forced to zero, so it is dropped from
    # the kernel's hot path (b=None).  Passing a [1, Out] bias is still
    # supported by the wrapper for generality.
    Ri = linear_lrp(Rj, Ai, W, b=None)
    Ri = jax.block_until_ready(Ri)

    # Pure-JAX reference of the same math (f32, highest matmul precision).
    z_ref = jnp.einsum("bi,oi->bo", Ai, W,
                       precision=jax.lax.Precision.HIGHEST) + EPS
    s_ref = Rj / z_ref
    ci_ref = jnp.einsum("bo,oi->bi", s_ref, W,
                        precision=jax.lax.Precision.HIGHEST)
    ref = Ai * ci_ref

    assert Ri.shape == ref.shape
    max_abs_err = float(jnp.max(jnp.abs(Ri - ref)))
    assert jnp.allclose(Ri, ref, atol=1e-3, rtol=2e-2), (
        f"mismatch vs reference, max abs err = {max_abs_err}")
    print("KERNEL_OK")
</pallas_src>

<mosaic_0001>
module attributes {stable_mosaic.version = 11 : i64} {
  func.func @_kernel_no_bias(%arg0: i32, %arg1: memref<8x128xf32, #tpu.memory_space<vmem>>, %arg2: memref<8x128xf32, #tpu.memory_space<vmem>>, %arg3: memref<128x128xf32, #tpu.memory_space<vmem>>, %arg4: memref<8x128xf32, #tpu.memory_space<vmem>>) attributes {dimension_semantics = [#tpu.dimension_semantics<parallel>], iteration_bounds = array<i64: 1>, scalar_prefetch = 0 : i64, scratch_operands = 0 : i64, tpu.core_type = #tpu.core_type<tc>, window_params = [{transform_indices = @transform_0, window_bounds = array<i64: 8, 128>}, {transform_indices = @transform_1, window_bounds = array<i64: 8, 128>}, {pipeline_mode = #tpu.pipeline_mode<synchronous>, transform_indices = @transform_2, window_bounds = array<i64: 128, 128>}, {transform_indices = @transform_3, window_bounds = array<i64: 8, 128>}]} {
    %c0 = arith.constant 0 : index
    %c0_0 = arith.constant 0 : index
    %0 = vector.load %arg2[%c0, %c0_0] : memref<8x128xf32, #tpu.memory_space<vmem>>, vector<8x128xf32>
    %c0_1 = arith.constant 0 : index
    %c0_2 = arith.constant 0 : index
    %1 = vector.load %arg3[%c0_1, %c0_2] : memref<128x128xf32, #tpu.memory_space<vmem>>, vector<128x128xf32>
    %c0_3 = arith.constant 0 : index
    %c0_4 = arith.constant 0 : index
    %2 = vector.load %arg1[%c0_3, %c0_4] : memref<8x128xf32, #tpu.memory_space<vmem>>, vector<8x128xf32>
    %cst = arith.constant dense<0.000000e+00> : vector<8x128xf32>
    %3 = tpu.matmul %0, %1, %cst {dimension_numbers = #tpu.dot_dimension_numbers<[1], [1], [0], [0], [0, 0, 1, 0], [], []>} : vector<8x128xf32>, vector<128x128xf32>, vector<8x128xf32> -> vector<8x128xf32>
    %cst_5 = arith.constant 9.99999997E-7 : f32
    %4 = vector.broadcast %cst_5 : f32 to vector<8x128xf32>
    %5 = arith.addf %3, %4 : vector<8x128xf32>
    %6 = arith.divf %2, %5 : vector<8x128xf32>
    %cst_6 = arith.constant dense<0.000000e+00> : vector<8x128xf32>
    %7 = tpu.matmul %6, %1, %cst_6 {dimension_numbers = #tpu.dot_dimension_numbers<[1], [0], [0], [1], [0, 0, 1, 1], [], []>} : vector<8x128xf32>, vector<128x128xf32>, vector<8x128xf32> -> vector<8x128xf32>
    %8 = arith.mulf %0, %7 : vector<8x128xf32>
    %c0_7 = arith.constant 0 : index
    %c0_8 = arith.constant 0 : index
    %9 = vector.load %arg4[%c0_7, %c0_8] : memref<8x128xf32, #tpu.memory_space<vmem>>, vector<8x128xf32>
    tpu.vector_store %arg4[%c0_7, %c0_8], %8 {strides = array<i32>} : memref<8x128xf32, #tpu.memory_space<vmem>>, vector<8x128xf32>,
    return
  }
  func.func @transform_0(%arg0: i32) -> (i32, i32) {
    %c0_i32 = arith.constant 0 : i32
    %c0_i32_0 = arith.constant 0 : i32
    return %arg0, %c0_i32 : i32, i32
  }
  func.func @transform_1(%arg0: i32) -> (i32, i32) {
    %c0_i32 = arith.constant 0 : i32
    %c0_i32_0 = arith.constant 0 : i32
    return %arg0, %c0_i32 : i32, i32
  }
  func.func @transform_2(%arg0: i32) -> (i32, i32) {
    %c0_i32 = arith.constant 0 : i32
    %c0_i32_0 = arith.constant 0 : i32
    %c0_i32_1 = arith.constant 0 : i32
    return %c0_i32, %c0_i32_0 : i32, i32
  }
  func.func @transform_3(%arg0: i32) -> (i32, i32) {
    %c0_i32 = arith.constant 0 : i32
    %c0_i32_0 = arith.constant 0 : i32
    return %arg0, %c0_i32 : i32, i32
  }
}

</mosaic_0001>

<llo_original>
// kernel: tpu_custom_call.1
$region0: #{tpu_custom_call.1}
  #allocation0 [shape = 'u32[]', space=smem, size = 0x4, offset = 0x4, fixed_abs, tag = 'smem constant byte address 0x4 - core index']
  #allocation1 [shape = 'u32[144,128]{1,0:T(1,128)}', space=vmem, size = 0x12000, scoped, tag = 'internal scratch']
  %s0 = inlined_call_operand.hbm [shape: f32[8,128], index: 0, kind: input, shape index: {}]
  %s1 = inlined_call_operand.hbm [shape: f32[8,128], index: 1, kind: input, shape index: {}]
  %s2 = inlined_call_operand.hbm [shape: f32[128,128], index: 2, kind: input, shape index: {}]
  %s3 = inlined_call_operand.hbm [shape: f32[8,128], index: 3, kind: output, shape index: {}]
  %s4 = sld [smem:[#allocation0]]
  $region34: #{tpu_custom_call.1} parent=0
    _
  %s6 = ssub.s32 1, %s4
  %s7 = scalar_select 0, %s6, %s4
  $region1: #{tpu_custom_call.1} parent=0
    #allocation2 [shape = 'u8[4096]{0}', space=vmem, size = 0x1000, scoped, tag = 'input window, operand 0, single buffered']
    #allocation3 [shape = 's32[1]{0}', space=sflag, size = 0x4, scoped, tag = 'scoped memory for tpu_custom_call.1']
    #allocation4 [shape = 's32[1]{0}', space=sflag, size = 0x4, scoped, tag = 'scoped memory for tpu_custom_call.1']
    #allocation5 [shape = 'u8[4096]{0}', space=vmem, size = 0x1000, scoped, tag = 'input window, operand 1, single buffered']
    #allocation6 [shape = 's32[1]{0}', space=sflag, size = 0x4, scoped, tag = 'scoped memory for tpu_custom_call.1']
    #allocation7 [shape = 'u8[65536]{0}', space=vmem, size = 0x10000, scoped, tag = 'input window, operand 2, single buffered']
    #allocation8 [shape = 'u8[4096]{0}', space=vmem, size = 0x1000, scoped, tag = 'output window, operand 0, single buffered']
    %8 = vsyncpa [#allocation3], 0
    %9 = vsyncpa [#allocation6], 0
    %10 = vsyncpa [#allocation4], 0
    // Predicated region
    $region2: #{tpu_custom_call.1} parent=1 // pred_check
      _
    $region3: #{tpu_custom_call.1} parent=1 // pred_check_branch
      %12 = sbr.rel (0) target = $region5
    $region4: #{tpu_custom_call.1} parent=1 // pred_region
      %s14 = ssub.s32 128, 128
      %15 = vsyncadd [#allocation3], %s14
      %s17 = sshll.u32 [#allocation2], 4
      %s18 = int_to_ptr.vmem [resolvable:$true] %s17
      %20 = dma.hbm_to_vmem [thread:$0]  %s0, 128, %s18, [#allocation3]
    $region5: #{tpu_custom_call.1} parent=1 // pred_fallthru
      _
    // Predicated region
    $region6: #{tpu_custom_call.1} parent=1 // pred_check
      _
    $region7: #{tpu_custom_call.1} parent=1 // pred_check_branch
      %22 = sbr.rel (0) target = $region9
    $region8: #{tpu_custom_call.1} parent=1 // pred_region
      %s24 = ssub.s32 128, 128
      %25 = vsyncadd [#allocation6], %s24
      %s27 = sshll.u32 [#allocation5], 4
      %s28 = int_to_ptr.vmem [resolvable:$true] %s27
      %30 = dma.hbm_to_vmem [thread:$0]  %s1, 128, %s28, [#allocation6]
    $region9: #{tpu_custom_call.1} parent=1 // pred_fallthru
      _
    // Predicated region
    $region10: #{tpu_custom_call.1} parent=1 // pred_check
      _
    $region11: #{tpu_custom_call.1} parent=1 // pred_check_branch
      %32 = sbr.rel (0) target = $region13
    $region12: #{tpu_custom_call.1} parent=1 // pred_region
      %s34 = ssub.s32 2048, 2048
      %35 = vsyncadd [#allocation6], %s34
      %s36 = sshll.u32 [#allocation7], 4
      %s37 = int_to_ptr.vmem [resolvable:$true] %s36
      %42 = dma.hbm_to_vmem [thread:$0]  %s2, 2048, %s37, [#allocation6], 128, 128, 8
    $region13: #{tpu_custom_call.1} parent=1 // pred_fallthru
      _
    // Predicated region
    $region14: #{tpu_custom_call.1} parent=1 // pred_check
      _
    $region15: #{tpu_custom_call.1} parent=1 // pred_check_branch
      %44 = sbr.rel (0) target = $region17
    $region16: #{tpu_custom_call.1} parent=1 // pred_region
      %45 = dma.done [#allocation3], 128
    $region17: #{tpu_custom_call.1} parent=1 // pred_fallthru
      _
    // Predicated region
    $region18: #{tpu_custom_call.1} parent=1 // pred_check
      _
    $region19: #{tpu_custom_call.1} parent=1 // pred_check_branch
      %47 = sbr.rel (0) target = $region21
    $region20: #{tpu_custom_call.1} parent=1 // pred_region
      %48 = dma.done [#allocation6], 128
    $region21: #{tpu_custom_call.1} parent=1 // pred_fallthru
      _
    // Predicated region
    $region22: #{tpu_custom_call.1} parent=1 // pred_check
      _
    $region23: #{tpu_custom_call.1} parent=1 // pred_check_branch
      %50 = sbr.rel (0) target = $region25
    $region24: #{tpu_custom_call.1} parent=1 // pred_region
      %51 = dma.done [#allocation6], 2048
    $region25: #{tpu_custom_call.1} parent=1 // pred_fallthru
      _
    %v52 = vld [vmem:[#allocation5] sm:$0xff]
    %v53 = vld [vmem:[#allocation7] sm:$0xff]
    %v54 = vld [vmem:[#allocation7 + $0x8] sm:$0xff]
    %v55 = vld [vmem:[#allocation7 + $0x10] sm:$0xff]
    %v56 = vld [vmem:[#allocation7 + $0x18] sm:$0xff]
    %v57 = vld [vmem:[#allocation7 + $0x20] sm:$0xff]
    %v58 = vld [vmem:[#allocation7 + $0x28] sm:$0xff]
    %v59 = vld [vmem:[#allocation7 + $0x30] sm:$0xff]
    %v60 = vld [vmem:[#allocation7 + $0x38] sm:$0xff]
    %v61 = vld [vmem:[#allocation7 + $0x40] sm:$0xff]
    %v62 = vld [vmem:[#allocation7 + $0x48] sm:$0xff]
    %v63 = vld [vmem:[#allocation7 + $0x50] sm:$0xff]
    %v64 = vld [vmem:[#allocation7 + $0x58] sm:$0xff]
    %v65 = vld [vmem:[#allocation7 + $0x60] sm:$0xff]
    %v66 = vld [vmem:[#allocation7 + $0x68] sm:$0xff]
    %v67 = vld [vmem:[#allocation7 + $0x70] sm:$0xff]
    %v68 = vld [vmem:[#allocation7 + $0x78] sm:$0xff]
    %v69 = vld [vmem:[#allocation2] sm:$0xff]
    %70 = vmatprep.subr.mxu0 0.0
    %71 = vmatpush1.xpose.msra.mxu0 %v53
    %72 = vmatprep.subr.mxu0 0.0
    %73 = vmatpush1.xpose.msra.mxu0 %v54
    %74 = vmatprep.subr.mxu0 0.0
    %75 = vmatpush1.xpose.msra.mxu0 %v55
    %76 = vmatprep.subr.mxu0 0.0
    %77 = vmatpush1.xpose.msra.mxu0 %v56
    %78 = vmatprep.subr.mxu0 0.0
    %79 = vmatpush1.xpose.msra.mxu0 %v57
    %80 = vmatprep.subr.mxu0 0.0
    %81 = vmatpush1.xpose.msra.mxu0 %v58
    %82 = vmatprep.subr.mxu0 0.0
    %83 = vmatpush1.xpose.msra.mxu0 %v59
    %84 = vmatprep.subr.mxu0 0.0
    %85 = vmatpush1.xpose.msra.mxu0 %v60
    %86 = vmatprep.subr.mxu0 0.0
    %87 = vmatpush1.xpose.msra.mxu0 %v61
    %88 = vmatprep.subr.mxu0 0.0
    %89 = vmatpush1.xpose.msra.mxu0 %v62
    %90 = vmatprep.subr.mxu0 0.0
    %91 = vmatpush1.xpose.msra.mxu0 %v63
    %92 = vmatprep.subr.mxu0 0.0
    %93 = vmatpush1.xpose.msra.mxu0 %v64
    %94 = vmatprep.subr.mxu0 0.0
    %95 = vmatpush1.xpose.msra.mxu0 %v65
    %96 = vmatprep.subr.mxu0 0.0
    %97 = vmatpush1.xpose.msra.mxu0 %v66
    %98 = vmatprep.subr.mxu0 0.0
    %99 = vmatpush1.xpose.msra.mxu0 %v67
    %100 = vmatprep.subr.mxu0 0.0
    %101 = vmatpush1.xpose.msra.mxu0 %v68
    %102 = vmatprep.subr.mxu0 0.0
    %103 = vmatpush1.xpose.msra.mxu0 0.0
    %104 = vmatprep.subr.mxu0 0.0
    %105 = vmatpush1.xpose.msra.mxu0 0.0
    %106 = vmatprep.subr.mxu0 0.0
    %107 = vmatpush1.xpose.msra.mxu0 0.0
    %108 = vmatprep.subr.mxu0 0.0
    %109 = vmatpush1.xpose.msra.mxu0 0.0
    %110 = vmatprep.subr.mxu0 0.0
    %111 = vmatpush1.xpose.msra.mxu0 0.0
    %112 = vmatprep.subr.mxu0 0.0
    %113 = vmatpush1.xpose.msra.mxu0 0.0
    %114 = vmatprep.subr.mxu0 0.0
    %115 = vmatpush1.xpose.msra.mxu0 0.0
    %116 = vmatprep.subr.mxu0 0.0
    %117 = vmatpush1.xpose.msra.mxu0 0.0
    %118 = vmatprep.subr.mxu0 0.0
    %119 = vmatpush1.xpose.msra.mxu0 0.0
    %120 = vmatprep.subr.mxu0 0.0
    %121 = vmatpush1.xpose.msra.mxu0 0.0
    %122 = vmatprep.subr.mxu0 0.0
    %123 = vmatpush1.xpose.msra.mxu0 0.0
    %124 = vmatprep.subr.mxu0 0.0
    %125 = vmatpush1.xpose.msra.mxu0 0.0
    %126 = vmatprep.subr.mxu0 0.0
    %127 = vmatpush1.xpose.msra.mxu0 0.0
    %128 = vmatprep.subr.mxu0 0.0
    %129 = vmatpush1.xpose.msra.mxu0 0.0
    %130 = vmatprep.subr.mxu0 0.0
    %131 = vmatpush1.xpose.msra.mxu0 0.0
    %132 = vmatprep.subr.mxu0 0.0
    %133 = vmatpush1.xpose.msra.mxu0 0.0
    %134 = vmatprep.mubr.f32.mxu0 0.0
    %135 = vmatmul.mubr.f32.gmra.mrb[0].mxu0 %v52
    %v136 = vpop.f32.mrb[0].mxu0
    %v137 = vadd.f32 1e-06, %v136
    %v138 = vpop.f32.mrb[0].mxu0
    %139 = vdwg.mxu0
    %v140 = vrcp.pop %v137
    %v141 = vmul.f32 %v69, %v140
    %142 = vmatprep.subr.mxu0 0.0
    %143 = vmatpush1.msra.mxu0 %v53
    %144 = vmatprep.subr.mxu0 0.0
    %145 = vmatpush1.msra.mxu0 %v54
    %146 = vmatprep.subr.mxu0 0.0
    %147 = vmatpush1.msra.mxu0 %v55
    %148 = vmatprep.subr.mxu0 0.0
    %149 = vmatpush1.msra.mxu0 %v56
    %150 = vmatprep.subr.mxu0 0.0
    %151 = vmatpush1.msra.mxu0 %v57
    %152 = vmatprep.subr.mxu0 0.0
    %153 = vmatpush1.msra.mxu0 %v58
    %154 = vmatprep.subr.mxu0 0.0
    %155 = vmatpush1.msra.mxu0 %v59
    %156 = vmatprep.subr.mxu0 0.0
    %157 = vmatpush1.msra.mxu0 %v60
    %158 = vmatprep.subr.mxu0 0.0
    %159 = vmatpush1.msra.mxu0 %v61
    %160 = vmatprep.subr.mxu0 0.0
    %161 = vmatpush1.msra.mxu0 %v62
    %162 = vmatprep.subr.mxu0 0.0
    %163 = vmatpush1.msra.mxu0 %v63
    %164 = vmatprep.subr.mxu0 0.0
    %165 = vmatpush1.msra.mxu0 %v64
    %166 = vmatprep.subr.mxu0 0.0
    %167 = vmatpush1.msra.mxu0 %v65
    %168 = vmatprep.subr.mxu0 0.0
    %169 = vmatpush1.msra.mxu0 %v66
    %170 = vmatprep.subr.mxu0 0.0
    %171 = vmatpush1.msra.mxu0 %v67
    %172 = vmatprep.subr.mxu0 0.0
    %173 = vmatpush1.msra.mxu0 %v68
    %174 = vmatprep.subr.mxu0 0.0
    %175 = vmatpush1.msra.mxu0 0.0
    %176 = vmatprep.subr.mxu0 0.0
    %177 = vmatpush1.msra.mxu0 0.0
    %178 = vmatprep.subr.mxu0 0.0
    %179 = vmatpush1.msra.mxu0 0.0
    %180 = vmatprep.subr.mxu0 0.0
    %181 = vmatpush1.msra.mxu0 0.0
    %182 = vmatprep.subr.mxu0 0.0
    %183 = vmatpush1.msra.mxu0 0.0
    %184 = vmatprep.subr.mxu0 0.0
    %185 = vmatpush1.msra.mxu0 0.0
    %186 = vmatprep.subr.mxu0 0.0
    %187 = vmatpush1.msra.mxu0 0.0
    %188 = vmatprep.subr.mxu0 0.0
    %189 = vmatpush1.msra.mxu0 0.0
    %190 = vmatprep.subr.mxu0 0.0
    %191 = vmatpush1.msra.mxu0 0.0
    %192 = vmatprep.subr.mxu0 0.0
    %193 = vmatpush1.msra.mxu0 0.0
    %194 = vmatprep.subr.mxu0 0.0
    %195 = vmatpush1.msra.mxu0 0.0
    %196 = vmatprep.subr.mxu0 0.0
    %197 = vmatpush1.msra.mxu0 0.0
    %198 = vmatprep.subr.mxu0 0.0
    %199 = vmatpush1.msra.mxu0 0.0
    %200 = vmatprep.subr.mxu0 0.0
    %201 = vmatpush1.msra.mxu0 0.0
    %202 = vmatprep.subr.mxu0 0.0
    %203 = vmatpush1.msra.mxu0 0.0
    %204 = vmatprep.subr.mxu0 0.0
    %205 = vmatpush1.msra.mxu0 0.0
    %206 = vmatprep.mubr.f32.mxu0 0.0
    %207 = vmatmul.mubr.f32.gmra.mrb[0].mxu0 %v141
    %v208 = vpop.f32.mrb[0].mxu0
    %v209 = vadd.f32 0.0, %v208
    %v210 = vpop.f32.mrb[0].mxu0
    %211 = vdwg.mxu0
    %v212 = vmul.f32 %v52, %v209
    %213 = vst [vmem:[#allocation8] sm:$0xff] %v212
    // Predicated region
    $region26: #{tpu_custom_call.1} parent=1 // pred_check
      _
    $region27: #{tpu_custom_call.1} parent=1 // pred_check_branch
      %215 = sbr.rel (0) target = $region29
    $region28: #{tpu_custom_call.1} parent=1 // pred_region
      %s217 = ssub.s32 128, 128
      %218 = vsyncadd [#allocation4], %s217
      %s220 = sshll.u32 [#allocation8], 4
      %s221 = int_to_ptr.vmem [resolvable:$true] %s220
      %223 = dma.vmem_to_hbm [thread:$0]  %s221, 128, %s3, [#allocation4]
    $region29: #{tpu_custom_call.1} parent=1 // pred_fallthru
      _
    // Predicated region
    $region30: #{tpu_custom_call.1} parent=1 // pred_check
      _
    $region31: #{tpu_custom_call.1} parent=1 // pred_check_branch
      %225 = sbr.rel (0) target = $region33
    $region32: #{tpu_custom_call.1} parent=1 // pred_region
      %226 = dma.done [#allocation4], 128
    $region33: #{tpu_custom_call.1} parent=1 // pred_fallthru
      _
    %227 = vsyncpa [#allocation3], 1
    %228 = vsyncpa [#allocation6], 1
    %229 = vsyncpa [#allocation4], 1

</llo_original>
